<compile_context>
chip_gen: v5e
topology: v5e:2x2
jax: 0.10.0
libtpu: 0.0.40
codegen_flags: <defaults>
</compile_context>

<pallas_src>
import functools

import jax
import jax.numpy as jnp
from jax.experimental import pallas as pl
from jax.experimental.pallas import tpu as pltpu

IN_FEATURES = 20
OUT_FEATURES = 10

# Below this batch size, XLA's fused dot beats a Pallas launch.
_PALLAS_MIN_BATCH = 1024


@functools.lru_cache(maxsize=None)
def _chip_config():
    """Per-generation batch-tile cap / VMEM limit (conservative when unknown)."""
    try:
        kind = jax.devices()[0].device_kind.lower()
    except Exception:  # pragma: no cover - defensive
        kind = ""
    if "v7" in kind:
        # 64 MiB VMEM, 2 TensorCores: 8192-row tiles (fits default 32 MiB
        # scoped VMEM double-buffered) and force >= 2 grid steps.
        return {"max_tb": 8192, "split_two": True, "vmem_limit": None}
    if "v5" in kind or "v6" in kind or "lite" in kind:
        # 128 MiB physical VMEM: 16384-row tiles; raise the scoped-VMEM limit
        # so the ~32 MiB double-buffered x+out footprint is accepted.
        return {"max_tb": 16384, "split_two": False, "vmem_limit": 64 * 1024 * 1024}
    # Unknown backend: conservative defaults.
    return {"max_tb": 8192, "split_two": False, "vmem_limit": None}


def _pick_tile(batch):
    """Batch tile: biggest that fits, multiple of 8 unless it covers all of B."""
    cfg = _chip_config()
    max_tb = cfg["max_tb"]
    if cfg["split_two"] and batch > 8:
        # >= 2 grid steps so both v7x TensorCores get a share of the batch.
        half = ((-(-batch // 2)) + 7) // 8 * 8  # round_up(ceil(B/2), 8)
        return min(max_tb, half)
    return batch if batch <= max_tb else max_tb


def _compiler_params():
    cfg = _chip_config()
    kwargs = {"dimension_semantics": ("parallel",)}  # batch tiles independent
    if cfg["vmem_limit"] is not None:
        kwargs["vmem_limit_bytes"] = cfg["vmem_limit"]
    return pltpu.CompilerParams(**kwargs)


# ----------------------------- kernels --------------------------------------

def _linear_kernel(x_ref, w_ref, b_ref, o_ref):
    # (TB, K) @ (K, N) on the MXU, bias add on the VPU, all in VMEM.
    o_ref[...] = (
        jnp.dot(x_ref[...], w_ref[...], preferred_element_type=jnp.float32)
        + b_ref[...]
    ).astype(o_ref.dtype)


def _dual_linear_kernel(x_ref, w1_ref, b1_ref, w2_ref, b2_ref, o1_ref, o2_ref):
    # Both branches from one HBM read of x; two resident weight tiles.
    x = x_ref[...]
    o1_ref[...] = (
        jnp.dot(x, w1_ref[...], preferred_element_type=jnp.float32) + b1_ref[...]
    ).astype(o1_ref.dtype)
    o2_ref[...] = (
        jnp.dot(x, w2_ref[...], preferred_element_type=jnp.float32) + b2_ref[...]
    ).astype(o2_ref.dtype)


# --------------------------- pallas wrappers ---------------------------------

def _linear_pallas_impl(x, w_t, b_row):
    B, K = x.shape
    N = w_t.shape[1]
    tb = _pick_tile(B)
    grid = (pl.cdiv(B, tb),)
    itemsize = jnp.dtype(x.dtype).itemsize
    cost = pl.CostEstimate(
        flops=2 * B * K * N,
        transcendentals=0,
        bytes_accessed=(x.size + w_t.size + b_row.size + B * N) * itemsize,
    )
    return pl.pallas_call(
        _linear_kernel,
        out_shape=jax.ShapeDtypeStruct((B, N), x.dtype),
        grid_spec=pl.GridSpec(
            grid=grid,
            in_specs=[
                pl.BlockSpec((tb, K), lambda i: (i, 0)),  # batch-tiled x
                pl.BlockSpec((K, N), lambda i: (0, 0)),   # resident weight
                pl.BlockSpec((1, N), lambda i: (0, 0)),   # resident bias
            ],
            out_specs=pl.BlockSpec((tb, N), lambda i: (i, 0)),
        ),
        compiler_params=_compiler_params(),
        cost_estimate=cost,
    )(x, w_t, b_row)


def _dual_linear_pallas_impl(x, w1_t, b1_row, w2_t, b2_row):
    B, K = x.shape
    N = w1_t.shape[1]
    tb = _pick_tile(B)
    grid = (pl.cdiv(B, tb),)
    itemsize = jnp.dtype(x.dtype).itemsize
    cost = pl.CostEstimate(
        flops=4 * B * K * N,
        transcendentals=0,
        bytes_accessed=(x.size + 2 * (w1_t.size + b1_row.size) + 2 * B * N)
        * itemsize,
    )
    return pl.pallas_call(
        _dual_linear_kernel,
        out_shape=(
            jax.ShapeDtypeStruct((B, N), x.dtype),
            jax.ShapeDtypeStruct((B, N), x.dtype),
        ),
        grid_spec=pl.GridSpec(
            grid=grid,
            in_specs=[
                pl.BlockSpec((tb, K), lambda i: (i, 0)),  # x (read once)
                pl.BlockSpec((K, N), lambda i: (0, 0)),   # w1 (resident)
                pl.BlockSpec((1, N), lambda i: (0, 0)),   # b1 (resident)
                pl.BlockSpec((K, N), lambda i: (0, 0)),   # w2 (resident)
                pl.BlockSpec((1, N), lambda i: (0, 0)),   # b2 (resident)
            ],
            out_specs=(
                pl.BlockSpec((tb, N), lambda i: (i, 0)),
                pl.BlockSpec((tb, N), lambda i: (i, 0)),
            ),
        ),
        compiler_params=_compiler_params(),
        cost_estimate=cost,
    )(x, w1_t, b1_row, w2_t, b2_row)


_linear_pallas = jax.jit(_linear_pallas_impl)
_dual_linear_pallas = jax.jit(_dual_linear_pallas_impl)
_linear_xla = jax.jit(lambda x, w_t, b_row: x @ w_t + b_row)  # small-B fast path


# ------------------------------- module --------------------------------------

class DualBranchNetwork:
    """JAX/Pallas mirror of the PyTorch DualBranchNetwork."""

    def __init__(self):
        # Deterministic init matching the PyTorch module's initialize():
        #   branch1.weight = ones(10, 20),     branch1.bias = zeros(10)
        #   branch2.weight = 2 * ones(10, 20), branch2.bias = zeros(10)
        # Stored pre-transposed as (in, out) and bias as (1, out) once.
        self.w1_t = jnp.ones((IN_FEATURES, OUT_FEATURES), dtype=jnp.float32)
        self.b1_row = jnp.zeros((1, OUT_FEATURES), dtype=jnp.float32)
        self.w2_t = jnp.ones((IN_FEATURES, OUT_FEATURES), dtype=jnp.float32) * 2.0
        self.b2_row = jnp.zeros((1, OUT_FEATURES), dtype=jnp.float32)

    def _params(self, branch):
        if branch == 1:
            return self.w1_t, self.b1_row
        if branch == 2:
            return self.w2_t, self.b2_row
        raise AssertionError("branch must be 1 or 2")

    def forward(self, inp, branch, use_pallas=None):
        """Same semantics as the PyTorch module: compute exactly one branch."""
        w_t, b_row = self._params(branch)
        if use_pallas is None:
            use_pallas = inp.shape[0] >= _PALLAS_MIN_BATCH
        if use_pallas:
            return _linear_pallas(inp, w_t, b_row)
        return _linear_xla(inp, w_t, b_row)

    __call__ = forward

    def forward_both(self, inp, use_pallas=None):
        """Fused fast path: both branches, one kernel, x streamed once."""
        if use_pallas is None:
            use_pallas = inp.shape[0] >= _PALLAS_MIN_BATCH
        if use_pallas:
            return _dual_linear_pallas(
                inp, self.w1_t, self.b1_row, self.w2_t, self.b2_row
            )
        return (
            _linear_xla(inp, self.w1_t, self.b1_row),
            _linear_xla(inp, self.w2_t, self.b2_row),
        )

    # Parameter-manipulation helpers mirroring the PyTorch module (value copy).
    def copy_params_val(self):
        self.w2_t = self.w1_t
        return self

    def mutate_params(self):
        self.w1_t = self.w1_t * 3.0
        return self


if __name__ == "__main__":
    key = jax.random.PRNGKey(0)
    model = DualBranchNetwork()

    # --- small batch (module-native shape): exercise the Pallas kernel directly
    B_small = 2
    x_small = jax.random.normal(key, (B_small, IN_FEATURES), dtype=jnp.float32)
    out1_s = model.forward(x_small, branch=1, use_pallas=True)
    out2_s = model.forward(x_small, branch=2, use_pallas=True)
    both1_s, both2_s = model.forward_both(x_small, use_pallas=True)

    # --- larger batch: default dispatch hits the tiled Pallas path
    B_big = 2050  # intentionally not a multiple of the tile size
    x_big = jax.random.normal(
        jax.random.fold_in(key, 1), (B_big, IN_FEATURES), dtype=jnp.float32
    )
    out1_b = model.forward(x_big, branch=1)
    out2_b = model.forward(x_big, branch=2)
    both1_b, both2_b = model.forward_both(x_big)

    jax.block_until_ready(
        (out1_s, out2_s, both1_s, both2_s, out1_b, out2_b, both1_b, both2_b)
    )

    # Reference checks against plain JAX linear layers.
    def ref(x, w, b):
        return x @ w + b

    for out, x, w, b in [
        (out1_s, x_small, model.w1_t, model.b1_row),
        (out2_s, x_small, model.w2_t, model.b2_row),
        (both1_s, x_small, model.w1_t, model.b1_row),
        (both2_s, x_small, model.w2_t, model.b2_row),
        (out1_b, x_big, model.w1_t, model.b1_row),
        (out2_b, x_big, model.w2_t, model.b2_row),
        (both1_b, x_big, model.w1_t, model.b1_row),
        (both2_b, x_big, model.w2_t, model.b2_row),
    ]:
        assert out.shape == (x.shape[0], OUT_FEATURES)
        assert jnp.allclose(out, ref(x, w, b), atol=1e-5), "mismatch vs reference"

    print("KERNEL_OK")
</pallas_src>

<mosaic_0001>
module attributes {stable_mosaic.version = 11 : i64} {
  func.func @_linear_kernel(%arg0: i32, %arg1: memref<2x20xf32, #tpu.memory_space<vmem>>, %arg2: memref<20x10xf32, #tpu.memory_space<vmem>>, %arg3: memref<1x10xf32, #tpu.memory_space<vmem>>, %arg4: memref<2x10xf32, #tpu.memory_space<vmem>>) attributes {dimension_semantics = [#tpu.dimension_semantics<parallel>], iteration_bounds = array<i64: 1>, scalar_prefetch = 0 : i64, scratch_operands = 0 : i64, tpu.core_type = #tpu.core_type<tc>, window_params = [{transform_indices = @transform_0, window_bounds = array<i64: 2, 20>}, {pipeline_mode = #tpu.pipeline_mode<synchronous>, transform_indices = @transform_1, window_bounds = array<i64: 20, 10>}, {pipeline_mode = #tpu.pipeline_mode<synchronous>, transform_indices = @transform_2, window_bounds = array<i64: 1, 10>}, {transform_indices = @transform_3, window_bounds = array<i64: 2, 10>}]} {
    %c0 = arith.constant 0 : index
    %c0_0 = arith.constant 0 : index
    %0 = vector.load %arg1[%c0, %c0_0] : memref<2x20xf32, #tpu.memory_space<vmem>>, vector<2x20xf32>
    %c0_1 = arith.constant 0 : index
    %c0_2 = arith.constant 0 : index
    %1 = vector.load %arg2[%c0_1, %c0_2] : memref<20x10xf32, #tpu.memory_space<vmem>>, vector<20x10xf32>
    %cst = arith.constant dense<0.000000e+00> : vector<2x10xf32>
    %2 = tpu.matmul %0, %1, %cst {dimension_numbers = #tpu.dot_dimension_numbers<[1], [0], [0], [1], [0, 0, 1, 1], [], []>} : vector<2x20xf32>, vector<20x10xf32>, vector<2x10xf32> -> vector<2x10xf32>
    %c0_3 = arith.constant 0 : index
    %c0_4 = arith.constant 0 : index
    %3 = vector.load %arg3[%c0_3, %c0_4] : memref<1x10xf32, #tpu.memory_space<vmem>>, vector<1x10xf32>
    %4 = vector.broadcast %3 : vector<1x10xf32> to vector<2x10xf32>
    %5 = arith.addf %2, %4 : vector<2x10xf32>
    %c0_5 = arith.constant 0 : index
    %c0_6 = arith.constant 0 : index
    %6 = vector.load %arg4[%c0_5, %c0_6] : memref<2x10xf32, #tpu.memory_space<vmem>>, vector<2x10xf32>
    tpu.vector_store %arg4[%c0_5, %c0_6], %5 {strides = array<i32>} : memref<2x10xf32, #tpu.memory_space<vmem>>, vector<2x10xf32>,
    return
  }
  func.func @transform_0(%arg0: i32) -> (i32, i32) {
    %c0_i32 = arith.constant 0 : i32
    %c0_i32_0 = arith.constant 0 : i32
    return %arg0, %c0_i32 : i32, i32
  }
  func.func @transform_1(%arg0: i32) -> (i32, i32) {
    %c0_i32 = arith.constant 0 : i32
    %c0_i32_0 = arith.constant 0 : i32
    %c0_i32_1 = arith.constant 0 : i32
    return %c0_i32, %c0_i32_0 : i32, i32
  }
  func.func @transform_2(%arg0: i32) -> (i32, i32) {
    %c0_i32 = arith.constant 0 : i32
    %c0_i32_0 = arith.constant 0 : i32
    %c0_i32_1 = arith.constant 0 : i32
    return %c0_i32, %c0_i32_0 : i32, i32
  }
  func.func @transform_3(%arg0: i32) -> (i32, i32) {
    %c0_i32 = arith.constant 0 : i32
    %c0_i32_0 = arith.constant 0 : i32
    return %arg0, %c0_i32 : i32, i32
  }
}

</mosaic_0001>

<llo_original>
// kernel: _linear_pallas_impl.1
$region0: #{_linear_pallas_impl.1}
  #allocation0 [shape = 'u32[]', space=smem, size = 0x4, offset = 0x4, fixed_abs, tag = 'smem constant byte address 0x4 - core index']
  #allocation1 [shape = 'u32[72,128]{1,0:T(1,128)}', space=vmem, size = 0x9000, scoped, tag = 'internal scratch']
  %s0 = inlined_call_operand.vmem [shape: f32[2,20], index: 0, kind: input, shape index: {}]
  %s1 = inlined_call_operand.vmem [shape: f32[20,10], index: 1, kind: input, shape index: {}]
  %s2 = inlined_call_operand.vmem [shape: f32[1,10], index: 2, kind: input, shape index: {}]
  %s3 = inlined_call_operand.hbm [shape: f32[2,10], index: 3, kind: output, shape index: {}]
  %s4 = sld [smem:[#allocation0]]
  $region22: #{_linear_pallas_impl.1} parent=0
    _
  %s6 = ssub.s32 1, %s4
  %s7 = scalar_select 0, %s6, %s4
  $region1: #{_linear_pallas_impl.1} parent=0
    #allocation2 [shape = 'u8[1024]{0}', space=vmem, size = 0x400, scoped, tag = 'output window, operand 0, single buffered']
    #allocation3 [shape = 's32[1]{0}', space=sflag, size = 0x4, scoped, tag = 'scoped memory for _linear_pallas_impl.1']
    %8 = vsyncpa [#allocation3], 0
    // Predicated region
    $region2: #{_linear_pallas_impl.1} parent=1 // pred_check
      _
    $region3: #{_linear_pallas_impl.1} parent=1 // pred_check_branch
      %10 = sbr.rel (0) target = $region5
    $region4: #{_linear_pallas_impl.1} parent=1 // pred_region
      _
    $region5: #{_linear_pallas_impl.1} parent=1 // pred_fallthru
      _
    // Predicated region
    $region6: #{_linear_pallas_impl.1} parent=1 // pred_check
      _
    $region7: #{_linear_pallas_impl.1} parent=1 // pred_check_branch
      %12 = sbr.rel (0) target = $region9
    $region8: #{_linear_pallas_impl.1} parent=1 // pred_region
      _
    $region9: #{_linear_pallas_impl.1} parent=1 // pred_fallthru
      _
    // Predicated region
    $region10: #{_linear_pallas_impl.1} parent=1 // pred_check
      _
    $region11: #{_linear_pallas_impl.1} parent=1 // pred_check_branch
      %14 = sbr.rel (0) target = $region13
    $region12: #{_linear_pallas_impl.1} parent=1 // pred_region
      _
    $region13: #{_linear_pallas_impl.1} parent=1 // pred_fallthru
      _
    %v15 = vld [vmem:[%s0] sm:$0x3]
    %v16 = vld [vmem:[%s1] sm:$0xff]
    %v17 = vld [vmem:[%s1 + $0x8] sm:$0xff]
    %v18 = vld [vmem:[%s1 + $0x10] sm:$0xf]
    %v19 = vld [vmem:[%s2] sm:$0x1]
    %v21 = vperm.slane %v19, 0
    %vm23 = vcmask 162816
    %v25 = vsel %vm23, %v15, 0
    %vm27 = vcmask 1043456
    %v29 = vsel %vm27, %v18, 0
    %31 = vmatpush.msra.mxu0 0.0
    %32 = vmatpush.msra.mxu0 0.0
    %33 = vmatpush.msra.mxu0 0.0
    %34 = vmatpush.msra.mxu0 0.0
    %35 = vmatpush.msra.mxu0 0.0
    %36 = vmatpush.msra.mxu0 0.0
    %37 = vmatpush.msra.mxu0 0.0
    %38 = vmatpush.msra.mxu0 0.0
    %39 = vmatpush.msra.mxu0 0.0
    %40 = vmatpush.msra.mxu0 0.0
    %41 = vmatpush.msra.mxu0 0.0
    %42 = vmatpush.msra.mxu0 0.0
    %43 = vmatpush.msra.mxu0 0.0
    %44 = vmatpush.msra.mxu0 %v29
    %45 = vmatpush.msra.mxu0 %v17
    %46 = vmatpush.msra.mxu0 %v16
    %47 = vmatmul.f32.gmra.mxu0 %v25
    %v48 = vpop.f32.mrf.mxu0
    %v49 = vadd.f32 %v21, %v48
    %50 = vdwg.mxu0
    %vm51 = vcmask 74752
    %52 = vst.msk [vmem:[#allocation2] sm:$0x3] %vm51, %v49
    // Predicated region
    $region14: #{_linear_pallas_impl.1} parent=1 // pred_check
      _
    $region15: #{_linear_pallas_impl.1} parent=1 // pred_check_branch
      %54 = sbr.rel (0) target = $region17
    $region16: #{_linear_pallas_impl.1} parent=1 // pred_region
      %56 = vsyncadd [#allocation3], 0
      %s58 = sshll.u32 [#allocation2], 4
      %s59 = int_to_ptr.vmem [resolvable:$true] %s58
      %s60 = sshll.u32 %s3, 4
      %s61 = int_to_ptr.hbm [resolvable:$true] %s60
      %63 = dma.vmem_to_hbm [thread:$0]  %s59, 32, %s61, [#allocation3]
    $region17: #{_linear_pallas_impl.1} parent=1 // pred_fallthru
      _
    // Predicated region
    $region18: #{_linear_pallas_impl.1} parent=1 // pred_check
      _
    $region19: #{_linear_pallas_impl.1} parent=1 // pred_check_branch
      %65 = sbr.rel (0) target = $region21
    $region20: #{_linear_pallas_impl.1} parent=1 // pred_region
      %67 = dma.done [#allocation3], 32
    $region21: #{_linear_pallas_impl.1} parent=1 // pred_fallthru
      _
    %68 = vsyncpa [#allocation3], 1

</llo_original>
